<compile_context>
chip_gen: v6e
topology: v6e:2x2x1
jax: 0.10.0
libtpu: 0.0.40
codegen_flags: <defaults>
</compile_context>

<pallas_src>
import jax
import jax.numpy as jnp
from jax.experimental import pallas as pl
from jax.experimental.pallas import tpu as pltpu


def _sublane_multiple(dtype) -> int:
    """Sublane alignment for the packed dtype (8 for 4B, 16 for 2B, 32 for 1B)."""
    itemsize = jnp.dtype(dtype).itemsize
    if itemsize >= 4:
        return 8
    if itemsize == 2:
        return 16
    return 32


def _choose_layout(total: int):
    """Pick a lane-dense 2-D view (cols a multiple of 128), or None if impossible."""
    for cols in (1024, 512, 256, 128):
        if total % cols == 0:
            return total // cols, cols
    return None


def _chunk_bounds(rows: int, sub: int, max_chunks: int = 4):
    """Static (start, size) row-chunks, sublane-aligned, up to max_chunks DMAs."""
    if rows <= sub:
        return [(0, rows)]
    n = min(max_chunks, max(1, rows // sub))
    chunk = -(-rows // n)                       # ceil div
    chunk = ((chunk + sub - 1) // sub) * sub    # sublane-aligned
    bounds = []
    start = 0
    while start < rows:
        size = min(chunk, rows - start)
        bounds.append((start, size))
        start += size
    return bounds


def _make_dma_copy_kernel(chunk_bounds):
    """HBM->HBM identity copy: issue all chunk DMAs, then wait on all of them."""
    def kernel(x_ref, o_ref, sem):
        copies = []
        for idx, (start, size) in enumerate(chunk_bounds):
            cp = pltpu.make_async_copy(
                x_ref.at[pl.ds(start, size), :],
                o_ref.at[pl.ds(start, size), :],
                sem.at[idx],
            )
            cp.start()
            copies.append(cp)
        for cp in copies:
            cp.wait()
    return kernel


def no_norm(x: jax.Array, fake: bool = True) -> jax.Array:
    """NoNorm.forward: pure identity. The no-copy path — use this in practice."""
    return x


def no_norm_pallas(x: jax.Array, fake: bool = True) -> jax.Array:
    """NoNorm.forward implemented as an explicit Pallas TPU HBM->HBM DMA copy."""
    orig_shape = x.shape
    dtype = x.dtype

    if x.size == 0 or x.ndim == 0:
        return x

    total = int(x.size)
    layout = _choose_layout(total)
    if layout is None:
        # Lane-sparse fallback (no divisor that is a multiple of 128): running a
        # kernel here would hit masked partial stores; the op is an identity, so
        # bail out with zero HBM traffic instead.
        return x

    rows, cols = layout
    itemsize = jnp.dtype(dtype).itemsize
    sub = _sublane_multiple(dtype)
    chunk_bounds = _chunk_bounds(rows, sub, max_chunks=4)

    x2 = x.reshape(rows, cols)

    out2 = pl.pallas_call(
        _make_dma_copy_kernel(chunk_bounds),
        out_shape=jax.ShapeDtypeStruct((rows, cols), dtype),
        in_specs=[pl.BlockSpec(memory_space=pl.ANY)],
        out_specs=pl.BlockSpec(memory_space=pl.ANY),
        scratch_shapes=[pltpu.SemaphoreType.DMA((len(chunk_bounds),))],
        cost_estimate=pl.CostEstimate(
            flops=0,
            transcendentals=0,
            bytes_accessed=2 * total * itemsize,
        ),
    )(x2)

    return out2.reshape(orig_shape)


if __name__ == "__main__":
    key = jax.random.PRNGKey(0)
    # NCHW input, like the PyTorch module would receive.
    x = jax.random.normal(key, (2, 4, 16, 16), dtype=jnp.float32)

    # Fast path (what production code should use): no copy at all.
    y_fast = no_norm(x)

    # Kernel path: exercised here to validate the Pallas implementation.
    y = no_norm_pallas(x)
    y = jax.block_until_ready(y)

    assert y.shape == x.shape
    assert y.dtype == x.dtype
    assert bool(jnp.all(y == x))
    assert (y_fast is x) or bool(jnp.all(y_fast == x))

    # Second small case (bf16, different fold) to exercise chunking/layout logic.
    x2 = jax.random.normal(jax.random.PRNGKey(1), (2, 4, 32, 32), dtype=jnp.bfloat16)
    y2 = jax.block_until_ready(no_norm_pallas(x2))
    assert y2.shape == x2.shape and y2.dtype == x2.dtype
    assert bool(jnp.all(y2 == x2))

    print("KERNEL_OK")
</pallas_src>

<mosaic_0001>
module attributes {stable_mosaic.version = 11 : i64} {
  func.func @kernel(%arg0: memref<2x1024xf32, #tpu.memory_space<any>>, %arg1: memref<2x1024xf32, #tpu.memory_space<any>>, %arg2: memref<1x!tpu.dma_semaphore, #tpu.memory_space<semaphore_mem>>) attributes {dimension_semantics = [], scalar_prefetch = 0 : i64, scratch_operands = 1 : i64, tpu.core_type = #tpu.core_type<tc>} {
    %c0_i32 = arith.constant 0 : i32
    %c0_i32_0 = arith.constant 0 : i32
    %c0_i32_1 = arith.constant 0 : i32
    %0 = tpu.memref_slice %arg0[%c0_i32_0, %c0_i32_1] : memref<2x1024xf32, #tpu.memory_space<any>> -> memref<2x1024xf32, #tpu.memory_space<any>>
    %c0_i32_2 = arith.constant 0 : i32
    %c0_i32_3 = arith.constant 0 : i32
    %1 = tpu.memref_slice %arg1[%c0_i32_2, %c0_i32_3] : memref<2x1024xf32, #tpu.memory_space<any>> -> memref<2x1024xf32, #tpu.memory_space<any>>
    %2 = tpu.memref_slice %arg2[%c0_i32] : memref<1x!tpu.dma_semaphore, #tpu.memory_space<semaphore_mem>> -> memref<1x!tpu.dma_semaphore, #tpu.memory_space<semaphore_mem>>
    %3 = tpu.memref_squeeze %2 : memref<1x!tpu.dma_semaphore, #tpu.memory_space<semaphore_mem>> -> memref<!tpu.dma_semaphore, #tpu.memory_space<semaphore_mem>>
    tpu.enqueue_dma source(%0 : memref<2x1024xf32, #tpu.memory_space<any>>) target(%1 : memref<2x1024xf32, #tpu.memory_space<any>>) target_semaphore(%3 : memref<!tpu.dma_semaphore, #tpu.memory_space<semaphore_mem>>)
    %c0_i32_4 = arith.constant 0 : i32
    %c0_i32_5 = arith.constant 0 : i32
    %c0_i32_6 = arith.constant 0 : i32
    %4 = tpu.memref_slice %arg0[%c0_i32_5, %c0_i32_6] : memref<2x1024xf32, #tpu.memory_space<any>> -> memref<2x1024xf32, #tpu.memory_space<any>>
    %c0_i32_7 = arith.constant 0 : i32
    %c0_i32_8 = arith.constant 0 : i32
    %5 = tpu.memref_slice %arg1[%c0_i32_7, %c0_i32_8] : memref<2x1024xf32, #tpu.memory_space<any>> -> memref<2x1024xf32, #tpu.memory_space<any>>
    %6 = tpu.memref_slice %arg2[%c0_i32_4] : memref<1x!tpu.dma_semaphore, #tpu.memory_space<semaphore_mem>> -> memref<1x!tpu.dma_semaphore, #tpu.memory_space<semaphore_mem>>
    %7 = tpu.memref_squeeze %6 : memref<1x!tpu.dma_semaphore, #tpu.memory_space<semaphore_mem>> -> memref<!tpu.dma_semaphore, #tpu.memory_space<semaphore_mem>>
    tpu.wait_dma2 semaphore(%7 : memref<!tpu.dma_semaphore, #tpu.memory_space<semaphore_mem>>) src(%4 : memref<2x1024xf32, #tpu.memory_space<any>>) dst(%5 : memref<2x1024xf32, #tpu.memory_space<any>>)
    return
  }
}

</mosaic_0001>

<llo_original>
// kernel: tpu_custom_call.1
$region0: #{tpu_custom_call.1}
  #allocation0 [shape = 'u32[]', space=smem, size = 0x4, offset = 0x4, fixed_abs, tag = 'smem constant byte address 0x4 - core index']
  #allocation1 [shape = 'u32[144,128]{1,0:T(1,128)}', space=vmem, size = 0x12000, scoped, tag = 'internal scratch']
  #allocation2 [shape = 's32[1]{0}', space=sflag, size = 0x4, scoped, tag = 'scratch operand']
  #allocation3 [shape = 's32[]', space=sflag, size = 0x4, offset = 0, fixed_abs, tag = 'sflag constant byte address 0x0 - dummy sync flag']
  #allocation4 [shape = 'u32[0]{0}', space=smem, size = 0, offset = 0, fixed_abs, tag = 'smem constant byte address 0x0 - null']
  %s0 = inlined_call_operand.hbm [shape: f32[2,1024], index: 0, kind: input, shape index: {}]
  %s1 = inlined_call_operand.hbm [shape: f32[2,1024], index: 1, kind: output, shape index: {}]
  %s2 = sld [smem:[#allocation0]]
  $region2: #{tpu_custom_call.1} parent=0
    _
  %s4 = ssub.s32 1, %s2
  %s5 = scalar_select 0, %s4, %s2
  %s7 = sshll.u32 1, 14
  %s8 = sxor.u32 4294967295, %s7
  %12 = dma.general %s0, 256, %s1, [#allocation2], 131072, [#allocation4], 0, 0
  %s13 = smul.u32 2, 1
  %s14 = smul.u32 %s13, 8
  %s15 = sshll.u32 %s14, 4
  %16 = dma.done [#allocation2], %s15
  %17 = vsyncmov [#allocation2]
  %s18 = vpop.sfrf %17
  %p19 = scmp.eq.s32.totalorder %s18, 0
  %p20 = pneg %p19
  %22 = shalt.err (%p20)

</llo_original>
